<compile_context>
chip_gen: v7x
topology: tpu7x:2x2x1
jax: 0.10.0
libtpu: 0.0.40
codegen_flags: <defaults>
</compile_context>

<pallas_src>
import functools

import jax
import jax.numpy as jnp
from jax import lax
from jax.experimental import pallas as pl
from jax.experimental.pallas import tpu as pltpu


def simcse_tile_kernel(ids_ref, table_ref, bias_ref, out_ref,
                       q_buf, t_buf, q_sem, t_sem, *, margin, scale):
    """One query-row tile of the fused SimCSE head.

    ids_ref   : [2B]      int32 SMEM (scalar prefetch): query ids then title ids
    table_ref : [V, E]    f32   HBM (pl.ANY): pre-projected CLS table (= emb @ W)
    bias_ref  : [1, E]    f32   VMEM: projection bias
    out_ref   : [8, 128]  f32   VMEM block: tile partial sum(lse - diag) at [0,0]
    q_buf     : [tq, E]   f32   VMEM scratch: gathered query rows of this tile
    t_buf     : [B,  E]   f32   VMEM scratch: gathered title rows (all B)
    q_sem/t_sem : DMA semaphores, one per gathered row
    """
    tq = q_buf.shape[0]
    bsz = t_buf.shape[0]
    i = pl.program_id(0)
    q0 = i * tq                          # first global query row of this tile

    # ---- blast DMA gather: tq query rows + B title rows, all in flight -----
    # (Titles are re-gathered per tile so "parallel" tiles stay independent;
    #  that is B rows of E f32 per tile — a few KiB.)
    q_copies = [
        pltpu.make_async_copy(table_ref.at[pl.ds(ids_ref[q0 + r], 1), :],
                              q_buf.at[pl.ds(r, 1), :], q_sem.at[r])
        for r in range(tq)]
    t_copies = [
        pltpu.make_async_copy(table_ref.at[pl.ds(ids_ref[bsz + r], 1), :],
                              t_buf.at[pl.ds(r, 1), :], t_sem.at[r])
        for r in range(bsz)]
    for c in q_copies + t_copies:
        c.start()
    for c in q_copies + t_copies:
        c.wait()

    # ---- bias + F.normalize(p=2, dim=-1): x * rsqrt(max(sumsq, eps^2)) -----
    # rsqrt/exp go to the EUP; everything stays f32 (v5e has no bf16 VPU/EUP).
    bias = bias_ref[...]
    eps2 = jnp.float32(1e-24)            # (1e-12)^2 — F.normalize eps on the norm
    q = q_buf[...] + bias                                        # [tq, E] f32
    qn = q * lax.rsqrt(jnp.maximum(jnp.sum(q * q, axis=-1, keepdims=True), eps2))
    t = t_buf[...] + bias                                        # [B, E] f32
    tn = t * lax.rsqrt(jnp.maximum(jnp.sum(t * t, axis=-1, keepdims=True), eps2))

    # nn.Dropout: eval-mode identity.
    # TODO(synk): training-mode dropout would need pltpu.prng_seed + a
    # stochastic mask; omitted to keep the forward deterministic.

    # ---- cosine sim tile [tq, B]: contract last dims (no transpose) --------
    sim = lax.dot_general(qn, tn, dimension_numbers=(((1,), (1,)), ((), ())),
                          preferred_element_type=jnp.float32)

    row = lax.broadcasted_iota(jnp.int32, (tq, bsz), 0)
    col = lax.broadcasted_iota(jnp.int32, (tq, bsz), 1)
    is_diag = col == (row + q0)          # label of global query row g is column g
    if margin != 0.0:                    # compile-time constant
        sim = sim - jnp.where(is_diag, jnp.float32(margin), jnp.float32(0.0))
    sim = sim * jnp.float32(scale)

    # ---- cross_entropy(sim, arange): per-row (lse - diag), tile partial sum -
    diag = jnp.sum(jnp.where(is_diag, sim, 0.0), axis=-1, keepdims=True)  # [tq,1]
    m = jnp.max(sim, axis=-1, keepdims=True)
    lse = jnp.log(jnp.sum(jnp.exp(sim - m), axis=-1, keepdims=True)) + m  # [tq,1]
    partial = jnp.sum(lse - diag)

    # Lane-dense (8,128) output block: partial at [0,0], zeros elsewhere
    # (wrapper reduces with a plain sum).
    r8 = lax.broadcasted_iota(jnp.int32, out_ref.shape, 0)
    c128 = lax.broadcasted_iota(jnp.int32, out_ref.shape, 1)
    out_ref[...] = jnp.where((r8 == 0) & (c128 == 0), partial, jnp.float32(0.0))


def simcse_loss(query_cls_ids, title_cls_ids, proj_table, bias,
                *, margin, scale, tile_q=None):
    """SimCSE loss.  `proj_table` is the offline-folded (encoder_emb @ W_out) table."""
    bsz = int(query_cls_ids.shape[0])
    vocab, ebd = proj_table.shape
    if tile_q is None:
        tile_q = bsz
    assert bsz % tile_q == 0, "batch must be divisible by the query tile size"
    num_tiles = bsz // tile_q

    # ids live in SMEM (scalar prefetch); clamp like jnp.take / nn.Embedding so
    # an out-of-range id cannot drive an out-of-bounds HBM DMA.
    ids = jnp.concatenate([query_cls_ids, title_cls_ids]).astype(jnp.int32)
    ids = jnp.clip(ids, 0, vocab - 1)                          # [2B] i32
    b2d = bias.reshape(1, -1).astype(jnp.float32)              # [1, E]

    kernel = functools.partial(simcse_tile_kernel,
                               margin=float(margin), scale=float(scale))
    grid_spec = pltpu.PrefetchScalarGridSpec(
        num_scalar_prefetch=1,
        grid=(num_tiles,),
        in_specs=[
            pl.BlockSpec(memory_space=pl.ANY),                  # proj table stays in HBM
            pl.BlockSpec((1, ebd), lambda i, ids: (0, 0)),      # bias, VMEM-resident
        ],
        out_specs=pl.BlockSpec((8, 128), lambda i, ids: (i, 0)),
        scratch_shapes=[
            pltpu.VMEM((tile_q, ebd), jnp.float32),             # gathered query rows
            pltpu.VMEM((bsz, ebd), jnp.float32),                # gathered title rows
            pltpu.SemaphoreType.DMA((tile_q,)),
            pltpu.SemaphoreType.DMA((bsz,)),
        ])
    partials = pl.pallas_call(
        kernel,
        out_shape=jax.ShapeDtypeStruct((num_tiles * 8, 128), jnp.float32),
        grid_spec=grid_spec,
        compiler_params=pltpu.CompilerParams(
            dimension_semantics=("parallel",)),                 # v7x: tiles split across TCs
    )(ids, proj_table.astype(jnp.float32), b2d)
    return jnp.sum(partials) * jnp.float32(1.0 / bsz)


if __name__ == "__main__":
    # Small, module-consistent shapes (vocab / hidden lane-aligned).
    B, S, V, H, E = 8, 8, 128, 128, 256     # batch, seq, vocab, hidden, ebdsize
    MARGIN, SCALE = 0.0, 20.0

    key = jax.random.PRNGKey(0)
    k_emb, k_w, k_b, k_q, k_t = jax.random.split(key, 5)

    # Deterministic "parameters".
    embedding_table = (jax.random.normal(k_emb, (V, H), dtype=jnp.float32)
                       * 0.02).astype(jnp.bfloat16)
    w = (jax.random.normal(k_w, (H, E), dtype=jnp.float32) * 0.02).astype(jnp.bfloat16)
    b = jax.random.normal(k_b, (E,), dtype=jnp.float32) * 0.02

    # Deterministic example inputs (token ids).
    query_input_ids = jax.random.randint(k_q, (B, S), 0, V, dtype=jnp.int32)
    title_input_ids = jax.random.randint(k_t, (B, S), 0, V, dtype=jnp.int32)

    # TODO(synk): pretrained AlbertModel transformer stack is not translated;
    # the synthetic encoder is a CLS (position 0) token-embedding lookup.
    # Since that encoder is lookup-only, the nn.Linear(hidden -> ebdsize) is
    # folded into the table once offline (f32 accumulation); the kernel then
    # DMA-gathers already-projected rows straight from HBM.
    q_ids = query_input_ids[:, 0]
    t_ids = title_input_ids[:, 0]
    proj_table = jnp.dot(embedding_table, w,
                         preferred_element_type=jnp.float32)    # [V, E] f32

    loss = simcse_loss(q_ids, t_ids, proj_table, b,
                       margin=MARGIN, scale=SCALE, tile_q=B // 2)
    jax.block_until_ready(loss)

    # Pure-JAX reference (same math, outside Pallas).
    def ref_loss(qi, ti):
        qc = jnp.take(embedding_table, qi, axis=0)
        tc = jnp.take(embedding_table, ti, axis=0)
        qp = jnp.dot(qc, w, preferred_element_type=jnp.float32) + b
        tp = jnp.dot(tc, w, preferred_element_type=jnp.float32) + b
        qn = qp / jnp.maximum(jnp.linalg.norm(qp, axis=-1, keepdims=True), 1e-12)
        tn = tp / jnp.maximum(jnp.linalg.norm(tp, axis=-1, keepdims=True), 1e-12)
        sim = (qn @ tn.T - MARGIN * jnp.eye(B)) * SCALE
        lse = jax.nn.logsumexp(sim, axis=-1)
        return jnp.mean(lse - jnp.diag(sim))

    ref = ref_loss(q_ids, t_ids)
    assert jnp.allclose(loss, ref, atol=1e-3, rtol=1e-3), (loss, ref)

    print("KERNEL_OK")
</pallas_src>

<mosaic_0001>
module attributes {stable_mosaic.version = 11 : i64} {
  func.func @simcse_tile_kernel(%arg0: i32, %arg1: memref<16xi32, #tpu.memory_space<smem>>, %arg2: memref<128x256xf32, #tpu.memory_space<any>>, %arg3: memref<1x256xf32, #tpu.memory_space<vmem>>, %arg4: memref<8x128xf32, #tpu.memory_space<vmem>>, %arg5: memref<4x256xf32, #tpu.memory_space<vmem>>, %arg6: memref<8x256xf32, #tpu.memory_space<vmem>>, %arg7: memref<4x!tpu.dma_semaphore, #tpu.memory_space<semaphore_mem>>, %arg8: memref<8x!tpu.dma_semaphore, #tpu.memory_space<semaphore_mem>>) attributes {dimension_semantics = [#tpu.dimension_semantics<parallel>], iteration_bounds = array<i64: 2>, scalar_prefetch = 1 : i64, scratch_operands = 4 : i64, tpu.core_type = #tpu.core_type<tc>, window_params = [{}, {pipeline_mode = #tpu.pipeline_mode<synchronous>, transform_indices = @transform_1, window_bounds = array<i64: 1, 256>}, {transform_indices = @transform_2, window_bounds = array<i64: 8, 128>}]} {
    %c4_i32 = arith.constant 4 : i32
    %0 = arith.muli %arg0, %c4_i32 : i32
    %c0_i32 = arith.constant 0 : i32
    %1 = arith.addi %0, %c0_i32 : i32
    %2 = arith.index_cast %1 : i32 to index
    %3 = memref.load %arg1[%2] : memref<16xi32, #tpu.memory_space<smem>>
    %c1_i32 = arith.constant 1 : i32
    %4 = arith.addi %0, %c1_i32 : i32
    %5 = arith.index_cast %4 : i32 to index
    %6 = memref.load %arg1[%5] : memref<16xi32, #tpu.memory_space<smem>>
    %c2_i32 = arith.constant 2 : i32
    %7 = arith.addi %0, %c2_i32 : i32
    %8 = arith.index_cast %7 : i32 to index
    %9 = memref.load %arg1[%8] : memref<16xi32, #tpu.memory_space<smem>>
    %c3_i32 = arith.constant 3 : i32
    %10 = arith.addi %0, %c3_i32 : i32
    %11 = arith.index_cast %10 : i32 to index
    %12 = memref.load %arg1[%11] : memref<16xi32, #tpu.memory_space<smem>>
    %c8 = arith.constant 8 : index
    %13 = memref.load %arg1[%c8] : memref<16xi32, #tpu.memory_space<smem>>
    %c9 = arith.constant 9 : index
    %14 = memref.load %arg1[%c9] : memref<16xi32, #tpu.memory_space<smem>>
    %c10 = arith.constant 10 : index
    %15 = memref.load %arg1[%c10] : memref<16xi32, #tpu.memory_space<smem>>
    %c11 = arith.constant 11 : index
    %16 = memref.load %arg1[%c11] : memref<16xi32, #tpu.memory_space<smem>>
    %c12 = arith.constant 12 : index
    %17 = memref.load %arg1[%c12] : memref<16xi32, #tpu.memory_space<smem>>
    %c13 = arith.constant 13 : index
    %18 = memref.load %arg1[%c13] : memref<16xi32, #tpu.memory_space<smem>>
    %c14 = arith.constant 14 : index
    %19 = memref.load %arg1[%c14] : memref<16xi32, #tpu.memory_space<smem>>
    %c15 = arith.constant 15 : index
    %20 = memref.load %arg1[%c15] : memref<16xi32, #tpu.memory_space<smem>>
    %c0_i32_0 = arith.constant 0 : i32
    %c0_i32_1 = arith.constant 0 : i32
    %21 = tpu.memref_slice %arg2[%3, %c0_i32_1] : memref<128x256xf32, #tpu.memory_space<any>> -> memref<1x256xf32, #tpu.memory_space<any>>
    %c0_i32_2 = arith.constant 0 : i32
    %c0_i32_3 = arith.constant 0 : i32
    %22 = tpu.memref_slice %arg5[%c0_i32_2, %c0_i32_3] : memref<4x256xf32, #tpu.memory_space<vmem>> -> memref<1x256xf32, #tpu.memory_space<vmem>>
    %23 = tpu.memref_slice %arg7[%c0_i32_0] : memref<4x!tpu.dma_semaphore, #tpu.memory_space<semaphore_mem>> -> memref<1x!tpu.dma_semaphore, #tpu.memory_space<semaphore_mem>>
    %24 = tpu.memref_squeeze %23 : memref<1x!tpu.dma_semaphore, #tpu.memory_space<semaphore_mem>> -> memref<!tpu.dma_semaphore, #tpu.memory_space<semaphore_mem>>
    tpu.enqueue_dma source(%21 : memref<1x256xf32, #tpu.memory_space<any>>) target(%22 : memref<1x256xf32, #tpu.memory_space<vmem>>) target_semaphore(%24 : memref<!tpu.dma_semaphore, #tpu.memory_space<semaphore_mem>>)
    %c1_i32_4 = arith.constant 1 : i32
    %c0_i32_5 = arith.constant 0 : i32
    %25 = tpu.memref_slice %arg2[%6, %c0_i32_5] : memref<128x256xf32, #tpu.memory_space<any>> -> memref<1x256xf32, #tpu.memory_space<any>>
    %c1_i32_6 = arith.constant 1 : i32
    %c0_i32_7 = arith.constant 0 : i32
    %26 = tpu.memref_slice %arg5[%c1_i32_6, %c0_i32_7] : memref<4x256xf32, #tpu.memory_space<vmem>> -> memref<1x256xf32, #tpu.memory_space<vmem>>
    %27 = tpu.memref_slice %arg7[%c1_i32_4] : memref<4x!tpu.dma_semaphore, #tpu.memory_space<semaphore_mem>> -> memref<1x!tpu.dma_semaphore, #tpu.memory_space<semaphore_mem>>
    %28 = tpu.memref_squeeze %27 : memref<1x!tpu.dma_semaphore, #tpu.memory_space<semaphore_mem>> -> memref<!tpu.dma_semaphore, #tpu.memory_space<semaphore_mem>>
    tpu.enqueue_dma source(%25 : memref<1x256xf32, #tpu.memory_space<any>>) target(%26 : memref<1x256xf32, #tpu.memory_space<vmem>>) target_semaphore(%28 : memref<!tpu.dma_semaphore, #tpu.memory_space<semaphore_mem>>)
    %c2_i32_8 = arith.constant 2 : i32
    %c0_i32_9 = arith.constant 0 : i32
    %29 = tpu.memref_slice %arg2[%9, %c0_i32_9] : memref<128x256xf32, #tpu.memory_space<any>> -> memref<1x256xf32, #tpu.memory_space<any>>
    %c2_i32_10 = arith.constant 2 : i32
    %c0_i32_11 = arith.constant 0 : i32
    %30 = tpu.memref_slice %arg5[%c2_i32_10, %c0_i32_11] : memref<4x256xf32, #tpu.memory_space<vmem>> -> memref<1x256xf32, #tpu.memory_space<vmem>>
    %31 = tpu.memref_slice %arg7[%c2_i32_8] : memref<4x!tpu.dma_semaphore, #tpu.memory_space<semaphore_mem>> -> memref<1x!tpu.dma_semaphore, #tpu.memory_space<semaphore_mem>>
    %32 = tpu.memref_squeeze %31 : memref<1x!tpu.dma_semaphore, #tpu.memory_space<semaphore_mem>> -> memref<!tpu.dma_semaphore, #tpu.memory_space<semaphore_mem>>
    tpu.enqueue_dma source(%29 : memref<1x256xf32, #tpu.memory_space<any>>) target(%30 : memref<1x256xf32, #tpu.memory_space<vmem>>) target_semaphore(%32 : memref<!tpu.dma_semaphore, #tpu.memory_space<semaphore_mem>>)
    %c3_i32_12 = arith.constant 3 : i32
    %c0_i32_13 = arith.constant 0 : i32
    %33 = tpu.memref_slice %arg2[%12, %c0_i32_13] : memref<128x256xf32, #tpu.memory_space<any>> -> memref<1x256xf32, #tpu.memory_space<any>>
    %c3_i32_14 = arith.constant 3 : i32
    %c0_i32_15 = arith.constant 0 : i32
    %34 = tpu.memref_slice %arg5[%c3_i32_14, %c0_i32_15] : memref<4x256xf32, #tpu.memory_space<vmem>> -> memref<1x256xf32, #tpu.memory_space<vmem>>
    %35 = tpu.memref_slice %arg7[%c3_i32_12] : memref<4x!tpu.dma_semaphore, #tpu.memory_space<semaphore_mem>> -> memref<1x!tpu.dma_semaphore, #tpu.memory_space<semaphore_mem>>
    %36 = tpu.memref_squeeze %35 : memref<1x!tpu.dma_semaphore, #tpu.memory_space<semaphore_mem>> -> memref<!tpu.dma_semaphore, #tpu.memory_space<semaphore_mem>>
    tpu.enqueue_dma source(%33 : memref<1x256xf32, #tpu.memory_space<any>>) target(%34 : memref<1x256xf32, #tpu.memory_space<vmem>>) target_semaphore(%36 : memref<!tpu.dma_semaphore, #tpu.memory_space<semaphore_mem>>)
    %c0_i32_16 = arith.constant 0 : i32
    %c0_i32_17 = arith.constant 0 : i32
    %37 = tpu.memref_slice %arg2[%13, %c0_i32_17] : memref<128x256xf32, #tpu.memory_space<any>> -> memref<1x256xf32, #tpu.memory_space<any>>
    %c0_i32_18 = arith.constant 0 : i32
    %c0_i32_19 = arith.constant 0 : i32
    %38 = tpu.memref_slice %arg6[%c0_i32_18, %c0_i32_19] : memref<8x256xf32, #tpu.memory_space<vmem>> -> memref<1x256xf32, #tpu.memory_space<vmem>>
    %39 = tpu.memref_slice %arg8[%c0_i32_16] : memref<8x!tpu.dma_semaphore, #tpu.memory_space<semaphore_mem>> -> memref<1x!tpu.dma_semaphore, #tpu.memory_space<semaphore_mem>>
    %40 = tpu.memref_squeeze %39 : memref<1x!tpu.dma_semaphore, #tpu.memory_space<semaphore_mem>> -> memref<!tpu.dma_semaphore, #tpu.memory_space<semaphore_mem>>
    tpu.enqueue_dma source(%37 : memref<1x256xf32, #tpu.memory_space<any>>) target(%38 : memref<1x256xf32, #tpu.memory_space<vmem>>) target_semaphore(%40 : memref<!tpu.dma_semaphore, #tpu.memory_space<semaphore_mem>>)
    %c1_i32_20 = arith.constant 1 : i32
    %c0_i32_21 = arith.constant 0 : i32
    %41 = tpu.memref_slice %arg2[%14, %c0_i32_21] : memref<128x256xf32, #tpu.memory_space<any>> -> memref<1x256xf32, #tpu.memory_space<any>>
    %c1_i32_22 = arith.constant 1 : i32
    %c0_i32_23 = arith.constant 0 : i32
    %42 = tpu.memref_slice %arg6[%c1_i32_22, %c0_i32_23] : memref<8x256xf32, #tpu.memory_space<vmem>> -> memref<1x256xf32, #tpu.memory_space<vmem>>
    %43 = tpu.memref_slice %arg8[%c1_i32_20] : memref<8x!tpu.dma_semaphore, #tpu.memory_space<semaphore_mem>> -> memref<1x!tpu.dma_semaphore, #tpu.memory_space<semaphore_mem>>
    %44 = tpu.memref_squeeze %43 : memref<1x!tpu.dma_semaphore, #tpu.memory_space<semaphore_mem>> -> memref<!tpu.dma_semaphore, #tpu.memory_space<semaphore_mem>>
    tpu.enqueue_dma source(%41 : memref<1x256xf32, #tpu.memory_space<any>>) target(%42 : memref<1x256xf32, #tpu.memory_space<vmem>>) target_semaphore(%44 : memref<!tpu.dma_semaphore, #tpu.memory_space<semaphore_mem>>)
    %c2_i32_24 = arith.constant 2 : i32
    %c0_i32_25 = arith.constant 0 : i32
    %45 = tpu.memref_slice %arg2[%15, %c0_i32_25] : memref<128x256xf32, #tpu.memory_space<any>> -> memref<1x256xf32, #tpu.memory_space<any>>
    %c2_i32_26 = arith.constant 2 : i32
    %c0_i32_27 = arith.constant 0 : i32
    %46 = tpu.memref_slice %arg6[%c2_i32_26, %c0_i32_27] : memref<8x256xf32, #tpu.memory_space<vmem>> -> memref<1x256xf32, #tpu.memory_space<vmem>>
    %47 = tpu.memref_slice %arg8[%c2_i32_24] : memref<8x!tpu.dma_semaphore, #tpu.memory_space<semaphore_mem>> -> memref<1x!tpu.dma_semaphore, #tpu.memory_space<semaphore_mem>>
    %48 = tpu.memref_squeeze %47 : memref<1x!tpu.dma_semaphore, #tpu.memory_space<semaphore_mem>> -> memref<!tpu.dma_semaphore, #tpu.memory_space<semaphore_mem>>
    tpu.enqueue_dma source(%45 : memref<1x256xf32, #tpu.memory_space<any>>) target(%46 : memref<1x256xf32, #tpu.memory_space<vmem>>) target_semaphore(%48 : memref<!tpu.dma_semaphore, #tpu.memory_space<semaphore_mem>>)
    %c3_i32_28 = arith.constant 3 : i32
    %c0_i32_29 = arith.constant 0 : i32
    %49 = tpu.memref_slice %arg2[%16, %c0_i32_29] : memref<128x256xf32, #tpu.memory_space<any>> -> memref<1x256xf32, #tpu.memory_space<any>>
    %c3_i32_30 = arith.constant 3 : i32
    %c0_i32_31 = arith.constant 0 : i32
    %50 = tpu.memref_slice %arg6[%c3_i32_30, %c0_i32_31] : memref<8x256xf32, #tpu.memory_space<vmem>> -> memref<1x256xf32, #tpu.memory_space<vmem>>
    %51 = tpu.memref_slice %arg8[%c3_i32_28] : memref<8x!tpu.dma_semaphore, #tpu.memory_space<semaphore_mem>> -> memref<1x!tpu.dma_semaphore, #tpu.memory_space<semaphore_mem>>
    %52 = tpu.memref_squeeze %51 : memref<1x!tpu.dma_semaphore, #tpu.memory_space<semaphore_mem>> -> memref<!tpu.dma_semaphore, #tpu.memory_space<semaphore_mem>>
    tpu.enqueue_dma source(%49 : memref<1x256xf32, #tpu.memory_space<any>>) target(%50 : memref<1x256xf32, #tpu.memory_space<vmem>>) target_semaphore(%52 : memref<!tpu.dma_semaphore, #tpu.memory_space<semaphore_mem>>)
    %c4_i32_32 = arith.constant 4 : i32
    %c0_i32_33 = arith.constant 0 : i32
    %53 = tpu.memref_slice %arg2[%17, %c0_i32_33] : memref<128x256xf32, #tpu.memory_space<any>> -> memref<1x256xf32, #tpu.memory_space<any>>
    %c4_i32_34 = arith.constant 4 : i32
    %c0_i32_35 = arith.constant 0 : i32
    %54 = tpu.memref_slice %arg6[%c4_i32_34, %c0_i32_35] : memref<8x256xf32, #tpu.memory_space<vmem>> -> memref<1x256xf32, #tpu.memory_space<vmem>>
    %55 = tpu.memref_slice %arg8[%c4_i32_32] : memref<8x!tpu.dma_semaphore, #tpu.memory_space<semaphore_mem>> -> memref<1x!tpu.dma_semaphore, #tpu.memory_space<semaphore_mem>>
    %56 = tpu.memref_squeeze %55 : memref<1x!tpu.dma_semaphore, #tpu.memory_space<semaphore_mem>> -> memref<!tpu.dma_semaphore, #tpu.memory_space<semaphore_mem>>
    tpu.enqueue_dma source(%53 : memref<1x256xf32, #tpu.memory_space<any>>) target(%54 : memref<1x256xf32, #tpu.memory_space<vmem>>) target_semaphore(%56 : memref<!tpu.dma_semaphore, #tpu.memory_space<semaphore_mem>>)
    %c5_i32 = arith.constant 5 : i32
    %c0_i32_36 = arith.constant 0 : i32
    %57 = tpu.memref_slice %arg2[%18, %c0_i32_36] : memref<128x256xf32, #tpu.memory_space<any>> -> memref<1x256xf32, #tpu.memory_space<any>>
    %c5_i32_37 = arith.constant 5 : i32
    %c0_i32_38 = arith.constant 0 : i32
    %58 = tpu.memref_slice %arg6[%c5_i32_37, %c0_i32_38] : memref<8x256xf32, #tpu.memory_space<vmem>> -> memref<1x256xf32, #tpu.memory_space<vmem>>
    %59 = tpu.memref_slice %arg8[%c5_i32] : memref<8x!tpu.dma_semaphore, #tpu.memory_space<semaphore_mem>> -> memref<1x!tpu.dma_semaphore, #tpu.memory_space<semaphore_mem>>
    %60 = tpu.memref_squeeze %59 : memref<1x!tpu.dma_semaphore, #tpu.memory_space<semaphore_mem>> -> memref<!tpu.dma_semaphore, #tpu.memory_space<semaphore_mem>>
    tpu.enqueue_dma source(%57 : memref<1x256xf32, #tpu.memory_space<any>>) target(%58 : memref<1x256xf32, #tpu.memory_space<vmem>>) target_semaphore(%60 : memref<!tpu.dma_semaphore, #tpu.memory_space<semaphore_mem>>)
    %c6_i32 = arith.constant 6 : i32
    %c0_i32_39 = arith.constant 0 : i32
    %61 = tpu.memref_slice %arg2[%19, %c0_i32_39] : memref<128x256xf32, #tpu.memory_space<any>> -> memref<1x256xf32, #tpu.memory_space<any>>
    %c6_i32_40 = arith.constant 6 : i32
    %c0_i32_41 = arith.constant 0 : i32
    %62 = tpu.memref_slice %arg6[%c6_i32_40, %c0_i32_41] : memref<8x256xf32, #tpu.memory_space<vmem>> -> memref<1x256xf32, #tpu.memory_space<vmem>>
    %63 = tpu.memref_slice %arg8[%c6_i32] : memref<8x!tpu.dma_semaphore, #tpu.memory_space<semaphore_mem>> -> memref<1x!tpu.dma_semaphore, #tpu.memory_space<semaphore_mem>>
    %64 = tpu.memref_squeeze %63 : memref<1x!tpu.dma_semaphore, #tpu.memory_space<semaphore_mem>> -> memref<!tpu.dma_semaphore, #tpu.memory_space<semaphore_mem>>
    tpu.enqueue_dma source(%61 : memref<1x256xf32, #tpu.memory_space<any>>) target(%62 : memref<1x256xf32, #tpu.memory_space<vmem>>) target_semaphore(%64 : memref<!tpu.dma_semaphore, #tpu.memory_space<semaphore_mem>>)
    %c7_i32 = arith.constant 7 : i32
    %c0_i32_42 = arith.constant 0 : i32
    %65 = tpu.memref_slice %arg2[%20, %c0_i32_42] : memref<128x256xf32, #tpu.memory_space<any>> -> memref<1x256xf32, #tpu.memory_space<any>>
    %c7_i32_43 = arith.constant 7 : i32
    %c0_i32_44 = arith.constant 0 : i32
    %66 = tpu.memref_slice %arg6[%c7_i32_43, %c0_i32_44] : memref<8x256xf32, #tpu.memory_space<vmem>> -> memref<1x256xf32, #tpu.memory_space<vmem>>
    %67 = tpu.memref_slice %arg8[%c7_i32] : memref<8x!tpu.dma_semaphore, #tpu.memory_space<semaphore_mem>> -> memref<1x!tpu.dma_semaphore, #tpu.memory_space<semaphore_mem>>
    %68 = tpu.memref_squeeze %67 : memref<1x!tpu.dma_semaphore, #tpu.memory_space<semaphore_mem>> -> memref<!tpu.dma_semaphore, #tpu.memory_space<semaphore_mem>>
    tpu.enqueue_dma source(%65 : memref<1x256xf32, #tpu.memory_space<any>>) target(%66 : memref<1x256xf32, #tpu.memory_space<vmem>>) target_semaphore(%68 : memref<!tpu.dma_semaphore, #tpu.memory_space<semaphore_mem>>)
    %c0_i32_45 = arith.constant 0 : i32
    %c0_i32_46 = arith.constant 0 : i32
    %69 = tpu.memref_slice %arg2[%3, %c0_i32_46] : memref<128x256xf32, #tpu.memory_space<any>> -> memref<1x256xf32, #tpu.memory_space<any>>
    %c0_i32_47 = arith.constant 0 : i32
    %c0_i32_48 = arith.constant 0 : i32
    %70 = tpu.memref_slice %arg5[%c0_i32_47, %c0_i32_48] : memref<4x256xf32, #tpu.memory_space<vmem>> -> memref<1x256xf32, #tpu.memory_space<vmem>>
    %71 = tpu.memref_slice %arg7[%c0_i32_45] : memref<4x!tpu.dma_semaphore, #tpu.memory_space<semaphore_mem>> -> memref<1x!tpu.dma_semaphore, #tpu.memory_space<semaphore_mem>>
    %72 = tpu.memref_squeeze %71 : memref<1x!tpu.dma_semaphore, #tpu.memory_space<semaphore_mem>> -> memref<!tpu.dma_semaphore, #tpu.memory_space<semaphore_mem>>
    tpu.wait_dma2 semaphore(%72 : memref<!tpu.dma_semaphore, #tpu.memory_space<semaphore_mem>>) src(%69 : memref<1x256xf32, #tpu.memory_space<any>>) dst(%70 : memref<1x256xf32, #tpu.memory_space<vmem>>)
    %c1_i32_49 = arith.constant 1 : i32
    %c0_i32_50 = arith.constant 0 : i32
    %73 = tpu.memref_slice %arg2[%6, %c0_i32_50] : memref<128x256xf32, #tpu.memory_space<any>> -> memref<1x256xf32, #tpu.memory_space<any>>
    %c1_i32_51 = arith.constant 1 : i32
    %c0_i32_52 = arith.constant 0 : i32
    %74 = tpu.memref_slice %arg5[%c1_i32_51, %c0_i32_52] : memref<4x256xf32, #tpu.memory_space<vmem>> -> memref<1x256xf32, #tpu.memory_space<vmem>>
    %75 = tpu.memref_slice %arg7[%c1_i32_49] : memref<4x!tpu.dma_semaphore, #tpu.memory_space<semaphore_mem>> -> memref<1x!tpu.dma_semaphore, #tpu.memory_space<semaphore_mem>>
    %76 = tpu.memref_squeeze %75 : memref<1x!tpu.dma_semaphore, #tpu.memory_space<semaphore_mem>> -> memref<!tpu.dma_semaphore, #tpu.memory_space<semaphore_mem>>
    tpu.wait_dma2 semaphore(%76 : memref<!tpu.dma_semaphore, #tpu.memory_space<semaphore_mem>>) src(%73 : memref<1x256xf32, #tpu.memory_space<any>>) dst(%74 : memref<1x256xf32, #tpu.memory_space<vmem>>)
    %c2_i32_53 = arith.constant 2 : i32
    %c0_i32_54 = arith.constant 0 : i32
    %77 = tpu.memref_slice %arg2[%9, %c0_i32_54] : memref<128x256xf32, #tpu.memory_space<any>> -> memref<1x256xf32, #tpu.memory_space<any>>
    %c2_i32_55 = arith.constant 2 : i32
    %c0_i32_56 = arith.constant 0 : i32
    %78 = tpu.memref_slice %arg5[%c2_i32_55, %c0_i32_56] : memref<4x256xf32, #tpu.memory_space<vmem>> -> memref<1x256xf32, #tpu.memory_space<vmem>>
    %79 = tpu.memref_slice %arg7[%c2_i32_53] : memref<4x!tpu.dma_semaphore, #tpu.memory_space<semaphore_mem>> -> memref<1x!tpu.dma_semaphore, #tpu.memory_space<semaphore_mem>>
    %80 = tpu.memref_squeeze %79 : memref<1x!tpu.dma_semaphore, #tpu.memory_space<semaphore_mem>> -> memref<!tpu.dma_semaphore, #tpu.memory_space<semaphore_mem>>
    tpu.wait_dma2 semaphore(%80 : memref<!tpu.dma_semaphore, #tpu.memory_space<semaphore_mem>>) src(%77 : memref<1x256xf32, #tpu.memory_space<any>>) dst(%78 : memref<1x256xf32, #tpu.memory_space<vmem>>)
    %c3_i32_57 = arith.constant 3 : i32
    %c0_i32_58 = arith.constant 0 : i32
    %81 = tpu.memref_slice %arg2[%12, %c0_i32_58] : memref<128x256xf32, #tpu.memory_space<any>> -> memref<1x256xf32, #tpu.memory_space<any>>
    %c3_i32_59 = arith.constant 3 : i32
    %c0_i32_60 = arith.constant 0 : i32
    %82 = tpu.memref_slice %arg5[%c3_i32_59, %c0_i32_60] : memref<4x256xf32, #tpu.memory_space<vmem>> -> memref<1x256xf32, #tpu.memory_space<vmem>>
    %83 = tpu.memref_slice %arg7[%c3_i32_57] : memref<4x!tpu.dma_semaphore, #tpu.memory_space<semaphore_mem>> -> memref<1x!tpu.dma_semaphore, #tpu.memory_space<semaphore_mem>>
    %84 = tpu.memref_squeeze %83 : memref<1x!tpu.dma_semaphore, #tpu.memory_space<semaphore_mem>> -> memref<!tpu.dma_semaphore, #tpu.memory_space<semaphore_mem>>
    tpu.wait_dma2 semaphore(%84 : memref<!tpu.dma_semaphore, #tpu.memory_space<semaphore_mem>>) src(%81 : memref<1x256xf32, #tpu.memory_space<any>>) dst(%82 : memref<1x256xf32, #tpu.memory_space<vmem>>)
    %c0_i32_61 = arith.constant 0 : i32
    %c0_i32_62 = arith.constant 0 : i32
    %85 = tpu.memref_slice %arg2[%13, %c0_i32_62] : memref<128x256xf32, #tpu.memory_space<any>> -> memref<1x256xf32, #tpu.memory_space<any>>
    %c0_i32_63 = arith.constant 0 : i32
    %c0_i32_64 = arith.constant 0 : i32
    %86 = tpu.memref_slice %arg6[%c0_i32_63, %c0_i32_64] : memref<8x256xf32, #tpu.memory_space<vmem>> -> memref<1x256xf32, #tpu.memory_space<vmem>>
    %87 = tpu.memref_slice %arg8[%c0_i32_61] : memref<8x!tpu.dma_semaphore, #tpu.memory_space<semaphore_mem>> -> memref<1x!tpu.dma_semaphore, #tpu.memory_space<semaphore_mem>>
    %88 = tpu.memref_squeeze %87 : memref<1x!tpu.dma_semaphore, #tpu.memory_space<semaphore_mem>> -> memref<!tpu.dma_semaphore, #tpu.memory_space<semaphore_mem>>
    tpu.wait_dma2 semaphore(%88 : memref<!tpu.dma_semaphore, #tpu.memory_space<semaphore_mem>>) src(%85 : memref<1x256xf32, #tpu.memory_space<any>>) dst(%86 : memref<1x256xf32, #tpu.memory_space<vmem>>)
    %c1_i32_65 = arith.constant 1 : i32
    %c0_i32_66 = arith.constant 0 : i32
    %89 = tpu.memref_slice %arg2[%14, %c0_i32_66] : memref<128x256xf32, #tpu.memory_space<any>> -> memref<1x256xf32, #tpu.memory_space<any>>
    %c1_i32_67 = arith.constant 1 : i32
    %c0_i32_68 = arith.constant 0 : i32
    %90 = tpu.memref_slice %arg6[%c1_i32_67, %c0_i32_68] : memref<8x256xf32, #tpu.memory_space<vmem>> -> memref<1x256xf32, #tpu.memory_space<vmem>>
    %91 = tpu.memref_slice %arg8[%c1_i32_65] : memref<8x!tpu.dma_semaphore, #tpu.memory_space<semaphore_mem>> -> memref<1x!tpu.dma_semaphore, #tpu.memory_space<semaphore_mem>>
    %92 = tpu.memref_squeeze %91 : memref<1x!tpu.dma_semaphore, #tpu.memory_space<semaphore_mem>> -> memref<!tpu.dma_semaphore, #tpu.memory_space<semaphore_mem>>
    tpu.wait_dma2 semaphore(%92 : memref<!tpu.dma_semaphore, #tpu.memory_space<semaphore_mem>>) src(%89 : memref<1x256xf32, #tpu.memory_space<any>>) dst(%90 : memref<1x256xf32, #tpu.memory_space<vmem>>)
    %c2_i32_69 = arith.constant 2 : i32
    %c0_i32_70 = arith.constant 0 : i32
    %93 = tpu.memref_slice %arg2[%15, %c0_i32_70] : memref<128x256xf32, #tpu.memory_space<any>> -> memref<1x256xf32, #tpu.memory_space<any>>
    %c2_i32_71 = arith.constant 2 : i32
    %c0_i32_72 = arith.constant 0 : i32
    %94 = tpu.memref_slice %arg6[%c2_i32_71, %c0_i32_72] : memref<8x256xf32, #tpu.memory_space<vmem>> -> memref<1x256xf32, #tpu.memory_space<vmem>>
    %95 = tpu.memref_slice %arg8[%c2_i32_69] : memref<8x!tpu.dma_semaphore, #tpu.memory_space<semaphore_mem>> -> memref<1x!tpu.dma_semaphore, #tpu.memory_space<semaphore_mem>>
    %96 = tpu.memref_squeeze %95 : memref<1x!tpu.dma_semaphore, #tpu.memory_space<semaphore_mem>> -> memref<!tpu.dma_semaphore, #tpu.memory_space<semaphore_mem>>
    tpu.wait_dma2 semaphore(%96 : memref<!tpu.dma_semaphore, #tpu.memory_space<semaphore_mem>>) src(%93 : memref<1x256xf32, #tpu.memory_space<any>>) dst(%94 : memref<1x256xf32, #tpu.memory_space<vmem>>)
    %c3_i32_73 = arith.constant 3 : i32
    %c0_i32_74 = arith.constant 0 : i32
    %97 = tpu.memref_slice %arg2[%16, %c0_i32_74] : memref<128x256xf32, #tpu.memory_space<any>> -> memref<1x256xf32, #tpu.memory_space<any>>
    %c3_i32_75 = arith.constant 3 : i32
    %c0_i32_76 = arith.constant 0 : i32
    %98 = tpu.memref_slice %arg6[%c3_i32_75, %c0_i32_76] : memref<8x256xf32, #tpu.memory_space<vmem>> -> memref<1x256xf32, #tpu.memory_space<vmem>>
    %99 = tpu.memref_slice %arg8[%c3_i32_73] : memref<8x!tpu.dma_semaphore, #tpu.memory_space<semaphore_mem>> -> memref<1x!tpu.dma_semaphore, #tpu.memory_space<semaphore_mem>>
    %100 = tpu.memref_squeeze %99 : memref<1x!tpu.dma_semaphore, #tpu.memory_space<semaphore_mem>> -> memref<!tpu.dma_semaphore, #tpu.memory_space<semaphore_mem>>
    tpu.wait_dma2 semaphore(%100 : memref<!tpu.dma_semaphore, #tpu.memory_space<semaphore_mem>>) src(%97 : memref<1x256xf32, #tpu.memory_space<any>>) dst(%98 : memref<1x256xf32, #tpu.memory_space<vmem>>)
    %c4_i32_77 = arith.constant 4 : i32
    %c0_i32_78 = arith.constant 0 : i32
    %101 = tpu.memref_slice %arg2[%17, %c0_i32_78] : memref<128x256xf32, #tpu.memory_space<any>> -> memref<1x256xf32, #tpu.memory_space<any>>
    %c4_i32_79 = arith.constant 4 : i32
    %c0_i32_80 = arith.constant 0 : i32
    %102 = tpu.memref_slice %arg6[%c4_i32_79, %c0_i32_80] : memref<8x256xf32, #tpu.memory_space<vmem>> -> memref<1x256xf32, #tpu.memory_space<vmem>>
    %103 = tpu.memref_slice %arg8[%c4_i32_77] : memref<8x!tpu.dma_semaphore, #tpu.memory_space<semaphore_mem>> -> memref<1x!tpu.dma_semaphore, #tpu.memory_space<semaphore_mem>>
    %104 = tpu.memref_squeeze %103 : memref<1x!tpu.dma_semaphore, #tpu.memory_space<semaphore_mem>> -> memref<!tpu.dma_semaphore, #tpu.memory_space<semaphore_mem>>
    tpu.wait_dma2 semaphore(%104 : memref<!tpu.dma_semaphore, #tpu.memory_space<semaphore_mem>>) src(%101 : memref<1x256xf32, #tpu.memory_space<any>>) dst(%102 : memref<1x256xf32, #tpu.memory_space<vmem>>)
    %c5_i32_81 = arith.constant 5 : i32
    %c0_i32_82 = arith.constant 0 : i32
    %105 = tpu.memref_slice %arg2[%18, %c0_i32_82] : memref<128x256xf32, #tpu.memory_space<any>> -> memref<1x256xf32, #tpu.memory_space<any>>
    %c5_i32_83 = arith.constant 5 : i32
    %c0_i32_84 = arith.constant 0 : i32
    %106 = tpu.memref_slice %arg6[%c5_i32_83, %c0_i32_84] : memref<8x256xf32, #tpu.memory_space<vmem>> -> memref<1x256xf32, #tpu.memory_space<vmem>>
    %107 = tpu.memref_slice %arg8[%c5_i32_81] : memref<8x!tpu.dma_semaphore, #tpu.memory_space<semaphore_mem>> -> memref<1x!tpu.dma_semaphore, #tpu.memory_space<semaphore_mem>>
    %108 = tpu.memref_squeeze %107 : memref<1x!tpu.dma_semaphore, #tpu.memory_space<semaphore_mem>> -> memref<!tpu.dma_semaphore, #tpu.memory_space<semaphore_mem>>
    tpu.wait_dma2 semaphore(%108 : memref<!tpu.dma_semaphore, #tpu.memory_space<semaphore_mem>>) src(%105 : memref<1x256xf32, #tpu.memory_space<any>>) dst(%106 : memref<1x256xf32, #tpu.memory_space<vmem>>)
    %c6_i32_85 = arith.constant 6 : i32
    %c0_i32_86 = arith.constant 0 : i32
    %109 = tpu.memref_slice %arg2[%19, %c0_i32_86] : memref<128x256xf32, #tpu.memory_space<any>> -> memref<1x256xf32, #tpu.memory_space<any>>
    %c6_i32_87 = arith.constant 6 : i32
    %c0_i32_88 = arith.constant 0 : i32
    %110 = tpu.memref_slice %arg6[%c6_i32_87, %c0_i32_88] : memref<8x256xf32, #tpu.memory_space<vmem>> -> memref<1x256xf32, #tpu.memory_space<vmem>>
    %111 = tpu.memref_slice %arg8[%c6_i32_85] : memref<8x!tpu.dma_semaphore, #tpu.memory_space<semaphore_mem>> -> memref<1x!tpu.dma_semaphore, #tpu.memory_space<semaphore_mem>>
    %112 = tpu.memref_squeeze %111 : memref<1x!tpu.dma_semaphore, #tpu.memory_space<semaphore_mem>> -> memref<!tpu.dma_semaphore, #tpu.memory_space<semaphore_mem>>
    tpu.wait_dma2 semaphore(%112 : memref<!tpu.dma_semaphore, #tpu.memory_space<semaphore_mem>>) src(%109 : memref<1x256xf32, #tpu.memory_space<any>>) dst(%110 : memref<1x256xf32, #tpu.memory_space<vmem>>)
    %c7_i32_89 = arith.constant 7 : i32
    %c0_i32_90 = arith.constant 0 : i32
    %113 = tpu.memref_slice %arg2[%20, %c0_i32_90] : memref<128x256xf32, #tpu.memory_space<any>> -> memref<1x256xf32, #tpu.memory_space<any>>
    %c7_i32_91 = arith.constant 7 : i32
    %c0_i32_92 = arith.constant 0 : i32
    %114 = tpu.memref_slice %arg6[%c7_i32_91, %c0_i32_92] : memref<8x256xf32, #tpu.memory_space<vmem>> -> memref<1x256xf32, #tpu.memory_space<vmem>>
    %115 = tpu.memref_slice %arg8[%c7_i32_89] : memref<8x!tpu.dma_semaphore, #tpu.memory_space<semaphore_mem>> -> memref<1x!tpu.dma_semaphore, #tpu.memory_space<semaphore_mem>>
    %116 = tpu.memref_squeeze %115 : memref<1x!tpu.dma_semaphore, #tpu.memory_space<semaphore_mem>> -> memref<!tpu.dma_semaphore, #tpu.memory_space<semaphore_mem>>
    tpu.wait_dma2 semaphore(%116 : memref<!tpu.dma_semaphore, #tpu.memory_space<semaphore_mem>>) src(%113 : memref<1x256xf32, #tpu.memory_space<any>>) dst(%114 : memref<1x256xf32, #tpu.memory_space<vmem>>)
    %c0 = arith.constant 0 : index
    %c0_93 = arith.constant 0 : index
    %117 = vector.load %arg3[%c0, %c0_93] : memref<1x256xf32, #tpu.memory_space<vmem>>, vector<1x256xf32>
    %c0_94 = arith.constant 0 : index
    %c0_95 = arith.constant 0 : index
    %118 = vector.load %arg5[%c0_94, %c0_95] : memref<4x256xf32, #tpu.memory_space<vmem>>, vector<4x256xf32>
    %119 = vector.broadcast %117 : vector<1x256xf32> to vector<4x256xf32>
    %120 = arith.addf %118, %119 : vector<4x256xf32>
    %121 = arith.mulf %120, %120 : vector<4x256xf32>
    %cst = arith.constant dense<0.000000e+00> : vector<4xf32>
    %122 = vector.multi_reduction <add>, %121, %cst [1] : vector<4x256xf32> to vector<4xf32>
    %123 = vector.shape_cast %122 : vector<4xf32> to vector<4x1xf32>
    %cst_96 = arith.constant 1.000000e-24 : f32
    %124 = vector.broadcast %cst_96 : f32 to vector<4x1xf32>
    %125 = arith.maximumf %123, %124 : vector<4x1xf32>
    %126 = math.rsqrt %125 : vector<4x1xf32>
    %127 = vector.broadcast %126 : vector<4x1xf32> to vector<4x256xf32>
    %128 = arith.mulf %120, %127 : vector<4x256xf32>
    %c0_97 = arith.constant 0 : index
    %c0_98 = arith.constant 0 : index
    %129 = vector.load %arg6[%c0_97, %c0_98] : memref<8x256xf32, #tpu.memory_space<vmem>>, vector<8x256xf32>
    %130 = vector.broadcast %117 : vector<1x256xf32> to vector<8x256xf32>
    %131 = arith.addf %129, %130 : vector<8x256xf32>
    %132 = arith.mulf %131, %131 : vector<8x256xf32>
    %cst_99 = arith.constant dense<0.000000e+00> : vector<8xf32>
    %133 = vector.multi_reduction <add>, %132, %cst_99 [1] : vector<8x256xf32> to vector<8xf32>
    %134 = vector.shape_cast %133 : vector<8xf32> to vector<8x1xf32>
    %cst_100 = arith.constant 1.000000e-24 : f32
    %135 = vector.broadcast %cst_100 : f32 to vector<8x1xf32>
    %136 = arith.maximumf %134, %135 : vector<8x1xf32>
    %137 = math.rsqrt %136 : vector<8x1xf32>
    %138 = vector.broadcast %137 : vector<8x1xf32> to vector<8x256xf32>
    %139 = arith.mulf %131, %138 : vector<8x256xf32>
    %cst_101 = arith.constant dense<0.000000e+00> : vector<4x8xf32>
    %140 = tpu.matmul %128, %139, %cst_101 {dimension_numbers = #tpu.dot_dimension_numbers<[1], [1], [0], [0], [0, 0, 1, 0], [], []>} : vector<4x256xf32>, vector<8x256xf32>, vector<4x8xf32> -> vector<4x8xf32>
    %141 = tpu.iota {dimensions = array<i32: 0>} : vector<4x8xi32>
    %142 = tpu.iota {dimensions = array<i32: 1>} : vector<4x8xi32>
    %143 = vector.broadcast %0 : i32 to vector<4x8xi32>
    %144 = arith.addi %141, %143 : vector<4x8xi32>
    %145 = arith.cmpi eq, %142, %144 : vector<4x8xi32>
    %cst_102 = arith.constant 2.000000e+01 : f32
    %146 = vector.broadcast %cst_102 : f32 to vector<4x8xf32>
    %147 = arith.mulf %140, %146 : vector<4x8xf32>
    %cst_103 = arith.constant 0.000000e+00 : f32
    %148 = vector.broadcast %cst_103 : f32 to vector<4x8xf32>
    %149 = arith.select %145, %147, %148 : vector<4x8xi1>, vector<4x8xf32>
    %cst_104 = arith.constant dense<0.000000e+00> : vector<4xf32>
    %150 = vector.multi_reduction <add>, %149, %cst_104 [1] : vector<4x8xf32> to vector<4xf32>
    %151 = vector.shape_cast %150 : vector<4xf32> to vector<4x1xf32>
    %cst_105 = arith.constant dense<0xFF800000> : vector<4xf32>
    %152 = vector.multi_reduction <maximumf>, %147, %cst_105 [1] : vector<4x8xf32> to vector<4xf32>
    %153 = vector.shape_cast %152 : vector<4xf32> to vector<4x1xf32>
    %154 = vector.broadcast %153 : vector<4x1xf32> to vector<4x8xf32>
    %155 = arith.subf %147, %154 : vector<4x8xf32>
    %156 = math.exp %155 : vector<4x8xf32>
    %cst_106 = arith.constant dense<0.000000e+00> : vector<4xf32>
    %157 = vector.multi_reduction <add>, %156, %cst_106 [1] : vector<4x8xf32> to vector<4xf32>
    %158 = vector.shape_cast %157 : vector<4xf32> to vector<4x1xf32>
    %159 = math.log %158 : vector<4x1xf32>
    %160 = arith.addf %159, %153 : vector<4x1xf32>
    %161 = arith.subf %160, %151 : vector<4x1xf32>
    %162 = vector.shape_cast %161 : vector<4x1xf32> to vector<1x4x1xf32>
    %cst_107 = arith.constant dense<0.000000e+00> : vector<1xf32>
    %163 = vector.multi_reduction <add>, %162, %cst_107 [1, 2] : vector<1x4x1xf32> to vector<1xf32>
    %164 = vector.shape_cast %163 : vector<1xf32> to vector<1x1x1xf32>
    %165 = vector.extract %164[0, 0, 0] : f32 from vector<1x1x1xf32>
    %166 = tpu.iota {dimensions = array<i32: 0>} : vector<8x128xi32>
    %167 = tpu.iota {dimensions = array<i32: 1>} : vector<8x128xi32>
    %c0_i32_108 = arith.constant 0 : i32
    %168 = vector.broadcast %c0_i32_108 : i32 to vector<8x128xi32>
    %169 = arith.cmpi eq, %166, %168 : vector<8x128xi32>
    %c0_i32_109 = arith.constant 0 : i32
    %170 = vector.broadcast %c0_i32_109 : i32 to vector<8x128xi32>
    %171 = arith.cmpi eq, %167, %170 : vector<8x128xi32>
    %172 = arith.andi %169, %171 : vector<8x128xi1>
    %cst_110 = arith.constant 0.000000e+00 : f32
    %173 = vector.broadcast %165 : f32 to vector<8x128xf32>
    %174 = vector.broadcast %cst_110 : f32 to vector<8x128xf32>
    %175 = arith.select %172, %173, %174 : vector<8x128xi1>, vector<8x128xf32>
    %c0_111 = arith.constant 0 : index
    %c0_112 = arith.constant 0 : index
    %176 = vector.load %arg4[%c0_111, %c0_112] : memref<8x128xf32, #tpu.memory_space<vmem>>, vector<8x128xf32>
    tpu.vector_store %arg4[%c0_111, %c0_112], %175 {strides = array<i32>} : memref<8x128xf32, #tpu.memory_space<vmem>>, vector<8x128xf32>,
    return
  }
  func.func @transform_1(%arg0: i32, %arg1: memref<16xi32, #tpu.memory_space<smem>>) -> (i32, i32) {
    %c0_i32 = arith.constant 0 : i32
    %c0_i32_0 = arith.constant 0 : i32
    %c0_i32_1 = arith.constant 0 : i32
    return %c0_i32, %c0_i32_0 : i32, i32
  }
  func.func @transform_2(%arg0: i32, %arg1: memref<16xi32, #tpu.memory_space<smem>>) -> (i32, i32) {
    %c0_i32 = arith.constant 0 : i32
    %c0_i32_0 = arith.constant 0 : i32
    return %arg0, %c0_i32 : i32, i32
  }
}

</mosaic_0001>

<llo_original>
// kernel: tpu_custom_call.1
$region0: #{tpu_custom_call.1}
  #allocation0 [shape = 'u32[]', space=smem, size = 0x4, offset = 0x4, fixed_abs, tag = 'smem constant byte address 0x4 - core index']
  #allocation1 [shape = 'u32[144,128]{1,0:T(1,128)}', space=vmem, size = 0x12000, scoped, tag = 'internal scratch']
  #allocation2 [shape = 'f32[4,256]{1,0:T(4,128)}', space=vmem, size = 0x1000, scoped, tag = 'scratch operand']
  #allocation3 [shape = 'f32[8,256]{1,0:T(8,128)}', space=vmem, size = 0x2000, scoped, tag = 'scratch operand']
  #allocation4 [shape = 's32[4]{0}', space=sflag, size = 0x10, scoped, tag = 'scratch operand']
  #allocation5 [shape = 's32[8]{0}', space=sflag, size = 0x20, scoped, tag = 'scratch operand']
  #allocation6 [shape = 's32[1]{0}', space=sflag, size = 0x4, scoped, tag = 'scoped memory for tpu_custom_call.1']
  #allocation7 [shape = 'u8[512]{0}', space=smem, size = 0x200, scoped, tag = 'prefetched SMEM operand 0']
  #allocation10 [shape = 's32[]', space=sflag, size = 0x4, offset = 0, fixed_abs, tag = 'sflag constant byte address 0x0 - dummy sync flag']
  #allocation11 [shape = 's32[]', space=sflag, size = 0x4, offset = 0, fixed_abs, tag = 'sflag constant byte address 0x0 - dummy sync flag']
  #allocation12 [shape = 's32[]', space=sflag, size = 0x4, offset = 0, fixed_abs, tag = 'sflag constant byte address 0x0 - dummy sync flag']
  #allocation13 [shape = 's32[]', space=sflag, size = 0x4, offset = 0, fixed_abs, tag = 'sflag constant byte address 0x0 - dummy sync flag']
  #allocation14 [shape = 's32[]', space=sflag, size = 0x4, offset = 0, fixed_abs, tag = 'sflag constant byte address 0x0 - dummy sync flag']
  #allocation15 [shape = 's32[]', space=sflag, size = 0x4, offset = 0, fixed_abs, tag = 'sflag constant byte address 0x0 - dummy sync flag']
  #allocation16 [shape = 's32[]', space=sflag, size = 0x4, offset = 0, fixed_abs, tag = 'sflag constant byte address 0x0 - dummy sync flag']
  #allocation17 [shape = 's32[]', space=sflag, size = 0x4, offset = 0, fixed_abs, tag = 'sflag constant byte address 0x0 - dummy sync flag']
  #allocation18 [shape = 's32[]', space=sflag, size = 0x4, offset = 0, fixed_abs, tag = 'sflag constant byte address 0x0 - dummy sync flag']
  #allocation19 [shape = 's32[]', space=sflag, size = 0x4, offset = 0, fixed_abs, tag = 'sflag constant byte address 0x0 - dummy sync flag']
  #allocation20 [shape = 's32[]', space=sflag, size = 0x4, offset = 0, fixed_abs, tag = 'sflag constant byte address 0x0 - dummy sync flag']
  #allocation21 [shape = 's32[]', space=sflag, size = 0x4, offset = 0, fixed_abs, tag = 'sflag constant byte address 0x0 - dummy sync flag']
  %s0 = inlined_call_operand.hbm [shape: s32[16], index: 0, kind: input, shape index: {}]
  %s1 = inlined_call_operand.hbm [shape: f32[128,256], index: 1, kind: input, shape index: {}]
  %s2 = inlined_call_operand.vmem [shape: f32[1,256], index: 2, kind: input, shape index: {}]
  %s3 = inlined_call_operand.hbm [shape: f32[16,128], index: 3, kind: output, shape index: {}]
  %s4 = sld [smem:[#allocation0]]
  $region37: #{tpu_custom_call.1} parent=0
    _
  %s6 = ssub.s32 1, %s4
  %s7 = scalar_select 0, %s6, %s4
  %9 = dma.hbm_to_smem %s0, 16, [#allocation7], [#allocation6]
  %10 = dma.done [#allocation6], 16
  %11 = sfence
  $region1: #{tpu_custom_call.1} parent=0
    #allocation8 [shape = 'u8[8192]{0}', space=vmem, size = 0x2000, scoped, tag = 'output window, operand 0']
    #allocation9 [shape = 's32[2]{0}', space=sflag, size = 0x8, scoped, tag = 'scoped memory for tpu_custom_call.1']
    %12 = vsyncpa [#allocation9], 0
    %s13 = scalar_lea.sflag [#allocation9], 1
    %14 = vsyncpa %s13, 0
    loop: start=0, step=1, limit=4
    $region2: #{tpu_custom_call.1} parent=1 // loop_pre_header
      _
    $region3: #{tpu_custom_call.1} parent=1 // loop_header
      %s16 = sphi 0, %s20
      %p17 = scmp.ge.s32.totalorder %s16, 4
      %s24 = sphi 0, %s24
      %s26 = sphi 0, %s24
      %s27 = sphi 0, %s26
      %s41 = sphi 0, %s27
      %s47 = sphi 0, %s49
      %s50 = sphi 0, %s47
      %s51 = sphi 0, %s50
      %s67 = sphi 0, %s51
    $region4: #{tpu_custom_call.1} parent=1 // loop_header_branch
      %19 = sbr.rel (%p17) target = $region8
    $region5: #{tpu_custom_call.1} parent=1 // loop_body
      %s21 = ssub.s32 %s16, 1
      %s22 = ssub.s32 %s16, 2
      %s23 = sadd.s32 %s16, 1
      %s25 = sadd.s32 %s24, 1
      %p28 = scmp.eq.s32.totalorder %s16, 1
      %p29 = scmp.ne.s32.totalorder %s24, %s26
      %p30 = scmp.eq.s32.totalorder %s16, 0
      %p31 = por %p29, %p30
      %p32 = scmp.ne.s32.totalorder %s24, %s26
      %p33 = scmp.eq.s32.totalorder %s21, 1
      %p34 = por %p32, %p33
      %p35 = scmp.ne.s32.totalorder %s26, %s27
      %p36 = scmp.eq.s32.totalorder %s21, 0
      %p37 = por %p35, %p36
      %p38 = scmp.ne.s32.totalorder %s26, %s27
      %p39 = scmp.eq.s32.totalorder %s22, 1
      %p40 = por %p38, %p39
      %p42 = scmp.ne.s32.totalorder %s27, %s41
      %p43 = scmp.eq.s32.totalorder %s22, 0
      %p44 = por %p42, %p43
      %s45 = ssub.s32 %s16, %s23
      %p46 = scmp.eq.s32.totalorder %s45, 0
      %s48 = sadd.s32 %s47, 1
      %s49 = scalar_select %p46, %s47, %s48
      %p52 = pneg %p46
      %p53 = scmp.eq.s32.totalorder %s16, 1
      %p54 = por %p52, %p53
      %p55 = scmp.ne.s32.totalorder %s47, %s50
      %p56 = scmp.eq.s32.totalorder %s16, 0
      %p57 = por %p55, %p56
      %p58 = scmp.ne.s32.totalorder %s47, %s50
      %p59 = scmp.eq.s32.totalorder %s21, 1
      %p60 = por %p58, %p59
      %p61 = scmp.ne.s32.totalorder %s50, %s51
      %p62 = scmp.eq.s32.totalorder %s21, 0
      %p63 = por %p61, %p62
      %p64 = scmp.ne.s32.totalorder %s50, %s51
      %p65 = scmp.eq.s32.totalorder %s22, 1
      %p66 = por %p64, %p65
      %p68 = scmp.ne.s32.totalorder %s51, %s67
      %p69 = scmp.eq.s32.totalorder %s22, 0
      %p70 = por %p68, %p69
      %p71 = scmp.le.s32.totalorder 1, %s16
      %p72 = scmp.lt.s32.totalorder %s16, 3
      %p73 = pnand %p71, %p72
      %p74 = pneg %p73
      // Predicated region
      $region9: #{tpu_custom_call.1} parent=5 // pred_check
        _
      $region10: #{tpu_custom_call.1} parent=5 // pred_check_branch
        %76 = sbr.rel (%p73) target = $region12
      $region11: #{tpu_custom_call.1} parent=5 // pred_region
        %s77 = ssub.s32 %s16, 1
        // Predicated region
        $region13: #{tpu_custom_call.1} parent=11 // pred_check
          %p78 = pneg %p37
        $region14: #{tpu_custom_call.1} parent=11 // pred_check_branch
          %80 = sbr.rel (%p78) target = $region16
        $region15: #{tpu_custom_call.1} parent=11 // pred_region
          _
        $region16: #{tpu_custom_call.1} parent=11 // pred_fallthru
          _
      $region12: #{tpu_custom_call.1} parent=5 // pred_fallthru
        _
      %p81 = scmp.lt.s32.totalorder %s16, 2
      // Predicated region
      $region17: #{tpu_custom_call.1} parent=5 // pred_check
        %p82 = pneg %p81
      $region18: #{tpu_custom_call.1} parent=5 // pred_check_branch
        %84 = sbr.rel (%p82) target = $region20
      $region19: #{tpu_custom_call.1} parent=5 // pred_region
        _
      $region20: #{tpu_custom_call.1} parent=5 // pred_fallthru
        _
      %p85 = scmp.le.s32.totalorder 1, %s16
      %p86 = scmp.lt.s32.totalorder %s16, 3
      %p87 = pnand %p85, %p86
      %p88 = pneg %p87
      // Predicated region
      $region21: #{tpu_custom_call.1} parent=5 // pred_check
        _
      $region22: #{tpu_custom_call.1} parent=5 // pred_check_branch
        %90 = sbr.rel (%p87) target = $region24
      $region23: #{tpu_custom_call.1} parent=5 // pred_region
        %s91 = ssub.s32 %s16, 1
        %p92 = pneg %p37
        %p93 = pneg %p34
        %p94 = pneg %p63
        %p95 = pneg %p60
        %s96 = sand.u32 %s50, 1
        %s97 = scalar_lea.sflag [#allocation9], %s96
        %s98 = sand.u32 %s50, 1
        %s99 = smul.addr %s98, 8
        %s100 = scalar_lea.vmem [#allocation8], %s99
        %s101 = smul.u32 %s21, 4
        %s102 = sld [smem:[#allocation7 + %s101]]
        %s103 = sadd.s32 %s101, 1
        %s104 = sld [smem:[#allocation7 + %s103]]
        %s105 = sadd.s32 %s101, 2
        %s106 = sld [smem:[#allocation7 + %s105]]
        %s107 = sadd.s32 %s101, 3
        %s108 = sld [smem:[#allocation7 + %s107]]
        %s109 = sld [smem:[#allocation7 + $0x8]]
        %s110 = sld [smem:[#allocation7 + $0x9]]
        %s111 = sld [smem:[#allocation7 + $0xa]]
        %s112 = sld [smem:[#allocation7 + $0xb]]
        %s113 = sld [smem:[#allocation7 + $0xc]]
        %s114 = sld [smem:[#allocation7 + $0xd]]
        %s115 = sld [smem:[#allocation7 + $0xe]]
        %s116 = sld [smem:[#allocation7 + $0xf]]
        %s117 = sshrl.u32 %s102, 3
        %s118 = sand.u32 %s102, 7
        %s119 = smul.u32 %s117, 16
        %s120 = sadd.s32 %s118, %s119
        %s121 = smul.addr %s120, 16
        %s122 = scalar_lea.hbm %s1, %s121
        %s124 = sshll.u32 [#allocation2], 4
        %s125 = int_to_ptr.vmem [resolvable:$true] %s124
        %127 = dma.hbm_to_vmem [thread:$0]  %s122, 32, %s125, [#allocation4], 128, 64, 1
        %s128 = sshrl.u32 %s104, 3
        %s129 = sand.u32 %s104, 7
        %s130 = smul.u32 %s128, 16
        %s131 = sadd.s32 %s129, %s130
        %s132 = smul.addr %s131, 16
        %s133 = scalar_lea.hbm %s1, %s132
        %s134 = scalar_lea.vmem [#allocation2], 1
        %s135 = scalar_lea.sflag [#allocation4], 1
        %s137 = sshll.u32 %s134, 4
        %s138 = int_to_ptr.vmem [resolvable:$true] %s137
        %140 = dma.hbm_to_vmem [thread:$0]  %s133, 32, %s138, %s135, 128, 64, 1
        %s141 = sshrl.u32 %s106, 3
        %s142 = sand.u32 %s106, 7
        %s143 = smul.u32 %s141, 16
        %s144 = sadd.s32 %s142, %s143
        %s145 = smul.addr %s144, 16
        %s146 = scalar_lea.hbm %s1, %s145
        %s147 = scalar_lea.vmem [#allocation2], 2
        %s148 = scalar_lea.sflag [#allocation4], 2
        %s150 = sshll.u32 %s147, 4
        %s151 = int_to_ptr.vmem [resolvable:$true] %s150
        %153 = dma.hbm_to_vmem [thread:$0]  %s146, 32, %s151, %s148, 128, 64, 1
        %s154 = sshrl.u32 %s108, 3
        %s155 = sand.u32 %s108, 7
        %s156 = smul.u32 %s154, 16
        %s157 = sadd.s32 %s155, %s156
        %s158 = smul.addr %s157, 16
        %s159 = scalar_lea.hbm %s1, %s158
        %s160 = scalar_lea.vmem [#allocation2], 3
        %s161 = scalar_lea.sflag [#allocation4], 3
        %s163 = sshll.u32 %s160, 4
        %s164 = int_to_ptr.vmem [resolvable:$true] %s163
        %166 = dma.hbm_to_vmem [thread:$0]  %s159, 32, %s164, %s161, 128, 64, 1
        %s167 = sshrl.u32 %s109, 3
        %s168 = sand.u32 %s109, 7
        %s169 = smul.u32 %s167, 16
        %s170 = sadd.s32 %s168, %s169
        %s171 = smul.addr %s170, 16
        %s172 = scalar_lea.hbm %s1, %s171
        %s174 = sshll.u32 [#allocation3], 4
        %s175 = int_to_ptr.vmem [resolvable:$true] %s174
        %177 = dma.hbm_to_vmem [thread:$0]  %s172, 32, %s175, [#allocation5], 128, 128, 1
        %s178 = sshrl.u32 %s110, 3
        %s179 = sand.u32 %s110, 7
        %s180 = smul.u32 %s178, 16
        %s181 = sadd.s32 %s179, %s180
        %s182 = smul.addr %s181, 16
        %s183 = scalar_lea.hbm %s1, %s182
        %s184 = scalar_lea.vmem [#allocation3], 1
        %s185 = scalar_lea.sflag [#allocation5], 1
        %s187 = sshll.u32 %s184, 4
        %s188 = int_to_ptr.vmem [resolvable:$true] %s187
        %190 = dma.hbm_to_vmem [thread:$0]  %s183, 32, %s188, %s185, 128, 128, 1
        %s191 = sshrl.u32 %s111, 3
        %s192 = sand.u32 %s111, 7
        %s193 = smul.u32 %s191, 16
        %s194 = sadd.s32 %s192, %s193
        %s195 = smul.addr %s194, 16
        %s196 = scalar_lea.hbm %s1, %s195
        %s197 = scalar_lea.vmem [#allocation3], 2
        %s198 = scalar_lea.sflag [#allocation5], 2
        %s200 = sshll.u32 %s197, 4
        %s201 = int_to_ptr.vmem [resolvable:$true] %s200
        %203 = dma.hbm_to_vmem [thread:$0]  %s196, 32, %s201, %s198, 128, 128, 1
        %s204 = sshrl.u32 %s112, 3
        %s205 = sand.u32 %s112, 7
        %s206 = smul.u32 %s204, 16
        %s207 = sadd.s32 %s205, %s206
        %s208 = smul.addr %s207, 16
        %s209 = scalar_lea.hbm %s1, %s208
        %s210 = scalar_lea.vmem [#allocation3], 3
        %s211 = scalar_lea.sflag [#allocation5], 3
        %s213 = sshll.u32 %s210, 4
        %s214 = int_to_ptr.vmem [resolvable:$true] %s213
        %216 = dma.hbm_to_vmem [thread:$0]  %s209, 32, %s214, %s211, 128, 128, 1
        %s217 = sshrl.u32 %s113, 3
        %s218 = sand.u32 %s113, 7
        %s219 = smul.u32 %s217, 16
        %s220 = sadd.s32 %s218, %s219
        %s221 = smul.addr %s220, 16
        %s222 = scalar_lea.hbm %s1, %s221
        %s223 = scalar_lea.vmem [#allocation3], 4
        %s224 = scalar_lea.sflag [#allocation5], 4
        %s226 = sshll.u32 %s223, 4
        %s227 = int_to_ptr.vmem [resolvable:$true] %s226
        %229 = dma.hbm_to_vmem [thread:$0]  %s222, 32, %s227, %s224, 128, 128, 1
        %s230 = sshrl.u32 %s114, 3
        %s231 = sand.u32 %s114, 7
        %s232 = smul.u32 %s230, 16
        %s233 = sadd.s32 %s231, %s232
        %s234 = smul.addr %s233, 16
        %s235 = scalar_lea.hbm %s1, %s234
        %s236 = scalar_lea.vmem [#allocation3], 5
        %s237 = scalar_lea.sflag [#allocation5], 5
        %s239 = sshll.u32 %s236, 4
        %s240 = int_to_ptr.vmem [resolvable:$true] %s239
        %242 = dma.hbm_to_vmem [thread:$0]  %s235, 32, %s240, %s237, 128, 128, 1
        %s243 = sshrl.u32 %s115, 3
        %s244 = sand.u32 %s115, 7
        %s245 = smul.u32 %s243, 16
        %s246 = sadd.s32 %s244, %s245
        %s247 = smul.addr %s246, 16
        %s248 = scalar_lea.hbm %s1, %s247
        %s249 = scalar_lea.vmem [#allocation3], 6
        %s250 = scalar_lea.sflag [#allocation5], 6
        %s252 = sshll.u32 %s249, 4
        %s253 = int_to_ptr.vmem [resolvable:$true] %s252
        %255 = dma.hbm_to_vmem [thread:$0]  %s248, 32, %s253, %s250, 128, 128, 1
        %s256 = sshrl.u32 %s116, 3
        %s257 = sand.u32 %s116, 7
        %s258 = smul.u32 %s256, 16
        %s259 = sadd.s32 %s257, %s258
        %s260 = smul.addr %s259, 16
        %s261 = scalar_lea.hbm %s1, %s260
        %s262 = scalar_lea.vmem [#allocation3], 7
        %s263 = scalar_lea.sflag [#allocation5], 7
        %s265 = sshll.u32 %s262, 4
        %s266 = int_to_ptr.vmem [resolvable:$true] %s265
        %268 = dma.hbm_to_vmem [thread:$0]  %s261, 32, %s266, %s263, 128, 128, 1
        %s269 = smul.u32 1, 2
        %s270 = sshll.u32 %s269, 4
        %271 = dma.done [#allocation4], %s270
        %s272 = sshll.u32 %s269, 4
        %273 = dma.done %s135, %s272
        %s274 = sshll.u32 %s269, 4
        %275 = dma.done %s148, %s274
        %s276 = sshll.u32 %s269, 4
        %277 = dma.done %s161, %s276
        %s278 = sshll.u32 %s269, 4
        %279 = dma.done [#allocation5], %s278
        %s280 = sshll.u32 %s269, 4
        %281 = dma.done %s185, %s280
        %s282 = sshll.u32 %s269, 4
        %283 = dma.done %s198, %s282
        %s284 = sshll.u32 %s269, 4
        %285 = dma.done %s211, %s284
        %s286 = sshll.u32 %s269, 4
        %287 = dma.done %s224, %s286
        %s288 = sshll.u32 %s269, 4
        %289 = dma.done %s237, %s288
        %s290 = sshll.u32 %s269, 4
        %291 = dma.done %s250, %s290
        %s292 = sshll.u32 %s269, 4
        %293 = dma.done %s263, %s292
        %v294 = vld [vmem:[%s2] sm:$0x3]
        %v295 = vld [vmem:[#allocation2] sm:$0xff]
        %v297 = vlaneseq
        %v298 = vshrl.u32 %v297, 7
        %v299 = vsub.s32 0, %v298
        %v300 = vrot.slane %v294, %v299
        %v301 = vlaneseq
        %v302 = vshrl.u32 %v301, 7
        %v303 = vsub.s32 1, %v302
        %v304 = vrot.slane %v294, %v303
        %v305 = vcombine.low %v300, %v304
        %v307 = vadd.f32 %v295, %v305
        %v308 = vmul.f32 %v307, %v307
        %v310 = vcombine.high %v308, %v308
        %vm312 = vcmask 1043456
        %v313 = vsel %vm312, %v308, 0.0
        %v314 = vsel %vm312, %v310, 0.0
        %v315 = vadd.f32 %v313, %v314
        %316 = vadd.xlane.f32.xlu0 %v315
        %v317 = vpop.xlane.xlu0 %316
        %v318 = vmax.f32 %v317, 1e-24
        %v319 = vrsqrt.pop %v318
        %v322 = vunpack.c.l.s4 839922192
        %v323 = vunpack.c.0.s8 %v322
        %v324 = vlaneseq
        %v325 = vshrl.u32 %v324, 7
        %v326 = vsub.s32 %v323, %v325
        %v327 = vrot.slane %v319, %v326
        %v329 = vmul.f32 %v307, %v327
        %v330 = vld [vmem:[#allocation3] sm:$0xff]
        %v331 = vld [vmem:[#allocation3 + $0x8] sm:$0xff]
        %v334 = vadd.f32 %v330, %v300
        %v335 = vadd.f32 %v331, %v304
        %v336 = vmul.f32 %v334, %v334
        %v337 = vmul.f32 %v335, %v335
        %v338 = vadd.f32 %v336, %v337
        %339 = vadd.xlane.f32.xlu0 %v338
        %v340 = vpop.xlane.xlu0 %339
        %v341 = vmax.f32 %v340, 1e-24
        %v342 = vrsqrt.pop %v341
        %v343 = vmul.f32 %v334, %v342
        %v344 = vmul.f32 %v335, %v342
        %v346 = vcombine.high %v329, %v329
        %348 = vmatprep.subr.mxu0 %v344
        %349 = vmatpush1.xpose.msra.mxu0 %v343
        %350 = vmatprep.subr.mxu0 0.0
        %351 = vmatpush1.xpose.msra.mxu0 0.0
        %352 = vmatprep.subr.mxu0 0.0
        %353 = vmatpush1.xpose.msra.mxu0 0.0
        %354 = vmatprep.subr.mxu0 0.0
        %355 = vmatpush1.xpose.msra.mxu0 0.0
        %356 = vmatprep.subr.mxu0 0.0
        %357 = vmatpush1.xpose.msra.mxu0 0.0
        %358 = vmatprep.subr.mxu0 0.0
        %359 = vmatpush1.xpose.msra.mxu0 0.0
        %360 = vmatprep.subr.mxu0 0.0
        %361 = vmatpush1.xpose.msra.mxu0 0.0
        %362 = vmatprep.subr.mxu0 0.0
        %363 = vmatpush1.xpose.msra.mxu0 0.0
        %364 = vmatprep.subr.mxu0 0.0
        %365 = vmatpush1.xpose.msra.mxu0 0.0
        %366 = vmatprep.subr.mxu0 0.0
        %367 = vmatpush1.xpose.msra.mxu0 0.0
        %368 = vmatprep.subr.mxu0 0.0
        %369 = vmatpush1.xpose.msra.mxu0 0.0
        %370 = vmatprep.subr.mxu0 0.0
        %371 = vmatpush1.xpose.msra.mxu0 0.0
        %372 = vmatprep.subr.mxu0 0.0
        %373 = vmatpush1.xpose.msra.mxu0 0.0
        %374 = vmatprep.subr.mxu0 0.0
        %375 = vmatpush1.xpose.msra.mxu0 0.0
        %376 = vmatprep.subr.mxu0 0.0
        %377 = vmatpush1.xpose.msra.mxu0 0.0
        %378 = vmatprep.subr.mxu0 0.0
        %379 = vmatpush1.xpose.msra.mxu0 0.0
        %380 = vmatprep.subr.mxu0 0.0
        %381 = vmatpush1.xpose.msra.mxu0 0.0
        %382 = vmatprep.subr.mxu0 0.0
        %383 = vmatpush1.xpose.msra.mxu0 0.0
        %384 = vmatprep.subr.mxu0 0.0
        %385 = vmatpush1.xpose.msra.mxu0 0.0
        %386 = vmatprep.subr.mxu0 0.0
        %387 = vmatpush1.xpose.msra.mxu0 0.0
        %388 = vmatprep.subr.mxu0 0.0
        %389 = vmatpush1.xpose.msra.mxu0 0.0
        %390 = vmatprep.subr.mxu0 0.0
        %391 = vmatpush1.xpose.msra.mxu0 0.0
        %392 = vmatprep.subr.mxu0 0.0
        %393 = vmatpush1.xpose.msra.mxu0 0.0
        %394 = vmatprep.subr.mxu0 0.0
        %395 = vmatpush1.xpose.msra.mxu0 0.0
        %396 = vmatprep.subr.mxu0 0.0
        %397 = vmatpush1.xpose.msra.mxu0 0.0
        %398 = vmatprep.subr.mxu0 0.0
        %399 = vmatpush1.xpose.msra.mxu0 0.0
        %400 = vmatprep.subr.mxu0 0.0
        %401 = vmatpush1.xpose.msra.mxu0 0.0
        %402 = vmatprep.subr.mxu0 0.0
        %403 = vmatpush1.xpose.msra.mxu0 0.0
        %404 = vmatprep.subr.mxu0 0.0
        %405 = vmatpush1.xpose.msra.mxu0 0.0
        %406 = vmatprep.subr.mxu0 0.0
        %407 = vmatpush1.xpose.msra.mxu0 0.0
        %408 = vmatprep.subr.mxu0 0.0
        %409 = vmatpush1.xpose.msra.mxu0 0.0
        %410 = vmatprep.subr.mxu0 0.0
        %411 = vmatpush1.xpose.msra.mxu0 0.0
        %412 = vmatprep.mubr.f32.mxu0 %v346
        %413 = vmatmul.mubr.f32.gmra.mrb[0].mxu0 %v329
        %v414 = vpop.f32.mrb[0].mxu0
        %v415 = vadd.f32 0.0, %v414
        %v416 = vpop.f32.mrb[0].mxu0
        %417 = vdwg.mxu0
        %v418 = vlaneseq
        %v419 = vshrl.u32 %v418, 7
        %v420 = vlaneseq
        %v421 = vand.u32 %v420, 127
        %v422 = vstv %s101
        %v423 = vadd.s32 %v419, %v422
        %vm424 = vcmp.eq.s32.totalorder %v421, %v423
        %v425 = vmul.f32 %v415, 20.0
        %v426 = vsel %vm424, %v425, 0.0
        %vm427 = vcmask 60416
        %v428 = vsel %vm427, %v426, 0.0
        %429 = vadd.xlane.f32.xlu0 %v428
        %v430 = vpop.xlane.xlu0 %429
        %v431 = vsel %vm427, %v425, -inf
        %432 = vmax.xlane.f32.xlu0 %v431
        %v433 = vpop.xlane.xlu0 %432
        %v434 = vsub.f32 %v425, %v433
        %v435 = vmul.f32 %v434, 1.442695
        %v436 = vpow.pop %v435
        %v437 = vsel %vm427, %v436, 0.0
        %438 = vadd.xlane.f32.xlu0 %v437
        %v439 = vpop.xlane.xlu0 %438
        %v440 = vlog2.pop %v439
        %v441 = vmul.f32 %v440, 0.6931472
        %v442 = vadd.f32 %v441, %v433
        %v443 = vsub.f32 %v442, %v430
        %vm444 = vcmask 3072
        %v445 = vsel %vm444, %v443, 0.0
        %446 = vadd.xlane.f32.xlu0 %v445
        %v447 = vpop.xlane.xlu0 %446
        %v448 = vrot.slane %v447, 4
        %v449 = vadd.f32 %v447, %v448
        %v450 = vrot.slane %v449, 2
        %v451 = vadd.f32 %v449, %v450
        %v452 = vrot.slane %v451, 1
        %v453 = vadd.f32 %v451, %v452
        %s454 = vtos %v453
        %vm455 = vcmp.eq.s32.totalorder %v419, 0
        %vm456 = vcmp.eq.s32.totalorder %v421, 0
        %vm457 = vmand %vm455, %vm456
        %v458 = vstv %s454
        %v459 = vsel %vm457, %v458, 0.0
        %460 = vst [vmem:[%s100] sm:$0xff] %v459
        %s461 = sand.u32 %s50, 1
        %s462 = scalar_lea.sflag [#allocation9], %s461
        %s463 = sand.u32 %s50, 1
        %s464 = smul.addr %s463, 8
        %s465 = scalar_lea.vmem [#allocation8], %s464
        // Predicated region
        $region25: #{tpu_custom_call.1} parent=23 // pred_check
          %p466 = pneg %p60
        $region26: #{tpu_custom_call.1} parent=23 // pred_check_branch
          %468 = sbr.rel (%p466) target = $region28
        $region27: #{tpu_custom_call.1} parent=23 // pred_region
          %s470 = ssub.s32 128, 128
          %471 = vsyncadd %s462, %s470
          %s472 = smul.addr %s21, 128
          %s473 = scalar_lea.hbm %s3, %s472
          %s475 = sshll.u32 %s465, 4
          %s476 = int_to_ptr.vmem [resolvable:$true] %s475
          %478 = dma.vmem_to_hbm [thread:$0]  %s476, 128, %s473, %s462
        $region28: #{tpu_custom_call.1} parent=23 // pred_fallthru
          _
      $region24: #{tpu_custom_call.1} parent=5 // pred_fallthru
        _
      %p479 = scmp.le.s32.totalorder 2, %s16
      // Predicated region
      $region29: #{tpu_custom_call.1} parent=5 // pred_check
        %p480 = pneg %p479
      $region30: #{tpu_custom_call.1} parent=5 // pred_check_branch
        %482 = sbr.rel (%p480) target = $region32
      $region31: #{tpu_custom_call.1} parent=5 // pred_region
        %s483 = ssub.s32 %s16, 2
        // Predicated region
        $region33: #{tpu_custom_call.1} parent=31 // pred_check
          %p484 = pneg %p66
        $region34: #{tpu_custom_call.1} parent=31 // pred_check_branch
          %486 = sbr.rel (%p484) target = $region36
        $region35: #{tpu_custom_call.1} parent=31 // pred_region
          %s487 = sand.u32 %s51, 1
          %s488 = scalar_lea.sflag [#allocation9], %s487
          %s489 = sand.u32 %s51, 1
          %s490 = smul.addr %s489, 8
          %s491 = scalar_lea.vmem [#allocation8], %s490
          %492 = dma.done %s488, 128
        $region36: #{tpu_custom_call.1} parent=31 // pred_fallthru
          _
      $region32: #{tpu_custom_call.1} parent=5 // pred_fallthru
        _
    $region6: #{tpu_custom_call.1} parent=1 // loop_footer
      %s20 = sadd.s32 1, %s16
    $region7: #{tpu_custom_call.1} parent=1 // loop_footer_branch
      %15 = sbr.rel target = $region3
    $region8: #{tpu_custom_call.1} parent=1 // loop_exit
      _
    %493 = vsyncpa [#allocation9], 1
    %s494 = scalar_lea.sflag [#allocation9], 1
    %495 = vsyncpa %s494, 1
  %496 = vsyncmov [#allocation4]
  %s497 = vpop.sfrf %496
  %p498 = scmp.eq.s32.totalorder %s497, 0
  %p499 = pneg %p498
  %501 = shalt.err (%p499)
  %s502 = scalar_lea.sflag [#allocation4], 1
  %503 = vsyncmov %s502
  %s504 = vpop.sfrf %503
  %p505 = scmp.eq.s32.totalorder %s504, 0
  %p506 = pneg %p505
  %508 = shalt.err (%p506)
  %s509 = scalar_lea.sflag [#allocation4], 2
  %510 = vsyncmov %s509
  %s511 = vpop.sfrf %510
  %p512 = scmp.eq.s32.totalorder %s511, 0
  %p513 = pneg %p512
  %515 = shalt.err (%p513)
  %s516 = scalar_lea.sflag [#allocation4], 3
  %517 = vsyncmov %s516
  %s518 = vpop.sfrf %517
  %p519 = scmp.eq.s32.totalorder %s518, 0
  %p520 = pneg %p519
  %522 = shalt.err (%p520)
  %523 = vsyncmov [#allocation5]
  %s524 = vpop.sfrf %523
  %p525 = scmp.eq.s32.totalorder %s524, 0
  %p526 = pneg %p525
  %528 = shalt.err (%p526)
  %s529 = scalar_lea.sflag [#allocation5], 1
  %530 = vsyncmov %s529
  %s531 = vpop.sfrf %530
  %p532 = scmp.eq.s32.totalorder %s531, 0
  %p533 = pneg %p532
  %535 = shalt.err (%p533)
  %s536 = scalar_lea.sflag [#allocation5], 2
  %537 = vsyncmov %s536
  %s538 = vpop.sfrf %537
  %p539 = scmp.eq.s32.totalorder %s538, 0
  %p540 = pneg %p539
  %542 = shalt.err (%p540)
  %s543 = scalar_lea.sflag [#allocation5], 3
  %544 = vsyncmov %s543
  %s545 = vpop.sfrf %544
  %p546 = scmp.eq.s32.totalorder %s545, 0
  %p547 = pneg %p546
  %549 = shalt.err (%p547)
  %s550 = scalar_lea.sflag [#allocation5], 4
  %551 = vsyncmov %s550
  %s552 = vpop.sfrf %551
  %p553 = scmp.eq.s32.totalorder %s552, 0
  %p554 = pneg %p553
  %556 = shalt.err (%p554)
  %s557 = scalar_lea.sflag [#allocation5], 5
  %558 = vsyncmov %s557
  %s559 = vpop.sfrf %558
  %p560 = scmp.eq.s32.totalorder %s559, 0
  %p561 = pneg %p560
  %563 = shalt.err (%p561)
  %s564 = scalar_lea.sflag [#allocation5], 6
  %565 = vsyncmov %s564
  %s566 = vpop.sfrf %565
  %p567 = scmp.eq.s32.totalorder %s566, 0
  %p568 = pneg %p567
  %570 = shalt.err (%p568)
  %s571 = scalar_lea.sflag [#allocation5], 7
  %572 = vsyncmov %s571
  %s573 = vpop.sfrf %572
  %p574 = scmp.eq.s32.totalorder %s573, 0
  %p575 = pneg %p574
  %577 = shalt.err (%p575)

</llo_original>
